<compile_context>
chip_gen: v5e
topology: v5e:2x2
jax: 0.10.0
libtpu: 0.0.40
codegen_flags: <defaults>
</compile_context>

<pallas_src>
import jax
import jax.numpy as jnp
from jax.experimental import pallas as pl
from jax.experimental.pallas import tpu as pltpu


def _round_up(v, m):
    return ((v + m - 1) // m) * m


def _cdiv(a, b):
    return (a + b - 1) // b


def _classifier_kernel(x_ref, w1_ref, b1_ref, w2_ref, b2_ref, y_ref):
    # x:  (TB, I_pad)    bf16
    # w1: (I_pad, N_pad) bf16   (pre-transposed: K along sublanes, N along lanes)
    # b1: (1, N_pad)     f32
    # w2: (N_pad, O_pad) bf16   (pre-transposed)
    # b2: (1, O_pad)     f32    (padded lanes = -1e30)
    # y:  (TB, O_pad)    f32
    x = x_ref[...]

    # ---- first linear: x @ W1  (NN matmul on MXU, bf16 in, f32 accumulate) ----
    a = jnp.dot(x, w1_ref[...], preferred_element_type=jnp.float32) + b1_ref[...]

    # ---- sigmoid(a) = 0.5*(tanh(a/2)+1): one EUP transcendental, f32 ----
    h = 0.5 * (jnp.tanh(0.5 * a) + 1.0)

    # ---- second linear: h @ W2  (bf16 MXU operands, f32 accumulate) ----
    z = jnp.dot(h.astype(jnp.bfloat16), w2_ref[...],
                preferred_element_type=jnp.float32) + b2_ref[...]

    # ---- softmax over dim=1 (lane axis), numerically stable, f32 ----
    z_max = jnp.max(z, axis=-1, keepdims=True)
    e = jnp.exp(z - z_max)
    denom = jnp.sum(e, axis=-1, keepdims=True)
    y_ref[...] = (e * pl.reciprocal(denom, approx=True)).astype(y_ref.dtype)


def prepare_classifier_params(w1, b1, w2, b2):
    """One-time prep of PyTorch nn.Linear params: pad to 128 lanes, cast to
    bf16, and pre-transpose to MXU-native (K, N) layout.  Call once at init,
    not per forward call."""
    w1 = jnp.asarray(w1, jnp.float32)
    b1 = jnp.asarray(b1, jnp.float32)
    w2 = jnp.asarray(w2, jnp.float32)
    b2 = jnp.asarray(b2, jnp.float32)

    N, I = w1.shape          # PyTorch (out, in)
    O = w2.shape[0]

    I_pad = _round_up(max(I, 1), 128)
    N_pad = _round_up(max(N, 1), 128)
    O_pad = _round_up(max(O, 1), 128)

    # Zero-padding the contraction dims leaves results unchanged; padded hidden
    # columns give sigmoid(0)=0.5 but hit all-zero W2 rows (contribute 0).
    w1_p = jnp.zeros((I_pad, N_pad), jnp.bfloat16).at[:I, :N].set(w1.T.astype(jnp.bfloat16))
    b1_p = jnp.zeros((1, N_pad), jnp.float32).at[0, :N].set(b1)
    w2_p = jnp.zeros((N_pad, O_pad), jnp.bfloat16).at[:N, :O].set(w2.T.astype(jnp.bfloat16))
    # Padded output logits get a huge (finite) negative bias -> exp()==0 under softmax.
    b2_p = jnp.full((1, O_pad), -1e30, jnp.float32).at[0, :O].set(b2)

    return {"w1": w1_p, "b1": b1_p, "w2": w2_p, "b2": b2_p, "dims": (I, N, O)}


def classifier_forward(x, params, *, tile_b=512):
    """x: (B, inputs) f32.  params: output of prepare_classifier_params."""
    x = jnp.asarray(x)
    B, I = x.shape
    I_dim, N, O = params["dims"]
    assert I == I_dim, "input feature dim mismatch"

    w1_p, b1_p, w2_p, b2_p = params["w1"], params["b1"], params["w2"], params["b2"]
    I_pad, N_pad = w1_p.shape
    O_pad = w2_p.shape[1]

    # Keep TILE_B * N_pad intermediates modest for v7x's 64 MiB VMEM.
    if N_pad >= 2048:
        tile_b = min(tile_b, 256)

    # Balanced batch tiles; >=2 grid steps when B is big enough so the
    # "parallel" grid axis can feed both v7x TensorCores.
    n_tiles = max(_cdiv(B, tile_b), 2 if B > 8 else 1)
    TILE_B = _round_up(_cdiv(B, n_tiles), 8)
    n_tiles = _cdiv(B, TILE_B)
    B_pad = n_tiles * TILE_B

    # Skip the x pad/copy when shapes are already aligned (only cast then).
    if B_pad == B and I_pad == I:
        x_p = x.astype(jnp.bfloat16)
    else:
        x_p = jnp.zeros((B_pad, I_pad), jnp.bfloat16).at[:B, :I].set(x.astype(jnp.bfloat16))

    # VMEM budget: double-buffered x/y tiles + single-buffered weights + temps.
    est = (2 * TILE_B * I_pad * 2            # x bf16, double buffered
           + 2 * TILE_B * O_pad * 4          # y f32, double buffered
           + I_pad * N_pad * 2 + N_pad * 4   # w1 (bf16) + b1 (f32), single buffered
           + N_pad * O_pad * 2 + O_pad * 4   # w2 (bf16) + b2 (f32), single buffered
           + TILE_B * N_pad * 10             # a (f32), h (f32), h_bf16
           + TILE_B * O_pad * 8)             # z, e (f32)
    vmem_limit = int(min(110 * 2**20, max(32 * 2**20, 2 * est)))

    def _call(single_buffer_weights):
        if single_buffer_weights:
            def res(shape):
                return pl.BlockSpec(shape, lambda i: (0, 0),
                                    pipeline_mode=pl.Buffered(1))
        else:
            def res(shape):
                return pl.BlockSpec(shape, lambda i: (0, 0))

        return pl.pallas_call(
            _classifier_kernel,
            out_shape=jax.ShapeDtypeStruct((B_pad, O_pad), jnp.float32),
            grid=(n_tiles,),
            in_specs=[
                pl.BlockSpec((TILE_B, I_pad), lambda i: (i, 0)),  # x: tiled over batch
                res((I_pad, N_pad)),                              # W1: VMEM-resident
                res((1, N_pad)),                                  # b1: VMEM-resident
                res((N_pad, O_pad)),                              # W2: VMEM-resident
                res((1, O_pad)),                                  # b2: VMEM-resident
            ],
            out_specs=pl.BlockSpec((TILE_B, O_pad), lambda i: (i, 0)),
            compiler_params=pltpu.CompilerParams(
                dimension_semantics=("parallel",),
                vmem_limit_bytes=vmem_limit,
            ),
        )(x_p, w1_p, b1_p, w2_p, b2_p)

    try:
        y_pad = _call(True)
    except Exception:
        # Fallback for JAX versions without pipeline_mode single-buffering.
        y_pad = _call(False)

    if B_pad == B and O_pad == O:
        return y_pad
    return y_pad[:B, :O]


def classifier_reference(x, w1, b1, w2, b2):
    a = x @ w1.T + b1
    h = jax.nn.sigmoid(a)
    z = h @ w2.T + b2
    return jax.nn.softmax(z, axis=1)


if __name__ == "__main__":
    # Small shapes consistent with Classifier(inputs, outputs, neurons).
    batch, inputs, neurons, outputs = 8, 16, 32, 8

    key = jax.random.PRNGKey(0)
    kx, kw1, kb1, kw2, kb2 = jax.random.split(key, 5)

    x = jax.random.normal(kx, (batch, inputs), dtype=jnp.float32)
    # Deterministic synthetic parameters (PyTorch nn.Linear (out, in) layout).
    w1 = jax.random.normal(kw1, (neurons, inputs), dtype=jnp.float32) * 0.1
    b1 = jax.random.normal(kb1, (neurons,), dtype=jnp.float32) * 0.1
    w2 = jax.random.normal(kw2, (outputs, neurons), dtype=jnp.float32) * 0.1
    b2 = jax.random.normal(kb2, (outputs,), dtype=jnp.float32) * 0.1

    # One-time weight preparation (hoisted out of the forward path).
    params = prepare_classifier_params(w1, b1, w2, b2)

    y = classifier_forward(x, params)
    y = jax.block_until_ready(y)

    y_ref = classifier_reference(x, w1, b1, w2, b2)
    assert y.shape == (batch, outputs)
    # bf16 MXU operands + approx reciprocal -> relaxed tolerance.
    assert jnp.allclose(y, y_ref, atol=2e-2, rtol=2e-2), "mismatch vs reference"
    assert jnp.allclose(jnp.sum(y, axis=1), 1.0, atol=5e-3), "softmax rows must sum to 1"

    print("KERNEL_OK")
</pallas_src>

<mosaic_0001>
module attributes {stable_mosaic.version = 11 : i64} {
  func.func @_classifier_kernel(%arg0: i32, %arg1: memref<8x128xbf16, #tpu.memory_space<vmem>>, %arg2: memref<128x128xbf16, #tpu.memory_space<vmem>>, %arg3: memref<1x128xf32, #tpu.memory_space<vmem>>, %arg4: memref<128x128xbf16, #tpu.memory_space<vmem>>, %arg5: memref<1x128xf32, #tpu.memory_space<vmem>>, %arg6: memref<8x128xf32, #tpu.memory_space<vmem>>) attributes {dimension_semantics = [#tpu.dimension_semantics<parallel>], iteration_bounds = array<i64: 1>, scalar_prefetch = 0 : i64, scratch_operands = 0 : i64, tpu.core_type = #tpu.core_type<tc>, window_params = [{transform_indices = @transform_0, window_bounds = array<i64: 8, 128>}, {pipeline_mode = #tpu.pipeline_mode<synchronous>, transform_indices = @transform_1, window_bounds = array<i64: 128, 128>}, {pipeline_mode = #tpu.pipeline_mode<synchronous>, transform_indices = @transform_2, window_bounds = array<i64: 1, 128>}, {pipeline_mode = #tpu.pipeline_mode<synchronous>, transform_indices = @transform_3, window_bounds = array<i64: 128, 128>}, {pipeline_mode = #tpu.pipeline_mode<synchronous>, transform_indices = @transform_4, window_bounds = array<i64: 1, 128>}, {transform_indices = @transform_5, window_bounds = array<i64: 8, 128>}]} {
    %c0 = arith.constant 0 : index
    %c0_0 = arith.constant 0 : index
    %0 = vector.load %arg1[%c0, %c0_0] : memref<8x128xbf16, #tpu.memory_space<vmem>>, vector<8x128xbf16>
    %c0_1 = arith.constant 0 : index
    %c0_2 = arith.constant 0 : index
    %1 = vector.load %arg2[%c0_1, %c0_2] : memref<128x128xbf16, #tpu.memory_space<vmem>>, vector<128x128xbf16>
    %cst = arith.constant dense<0.000000e+00> : vector<8x128xf32>
    %2 = tpu.matmul %0, %1, %cst {dimension_numbers = #tpu.dot_dimension_numbers<[1], [0], [0], [1], [0, 0, 1, 1], [], []>} : vector<8x128xbf16>, vector<128x128xbf16>, vector<8x128xf32> -> vector<8x128xf32>
    %c0_3 = arith.constant 0 : index
    %c0_4 = arith.constant 0 : index
    %3 = vector.load %arg3[%c0_3, %c0_4] : memref<1x128xf32, #tpu.memory_space<vmem>>, vector<1x128xf32>
    %4 = vector.broadcast %3 : vector<1x128xf32> to vector<8x128xf32>
    %5 = arith.addf %2, %4 : vector<8x128xf32>
    %cst_5 = arith.constant 5.000000e-01 : f32
    %6 = vector.broadcast %cst_5 : f32 to vector<8x128xf32>
    %7 = arith.mulf %6, %5 : vector<8x128xf32>
    %8 = math.tanh %7 : vector<8x128xf32>
    %cst_6 = arith.constant 1.000000e+00 : f32
    %9 = vector.broadcast %cst_6 : f32 to vector<8x128xf32>
    %10 = arith.addf %8, %9 : vector<8x128xf32>
    %cst_7 = arith.constant 5.000000e-01 : f32
    %11 = vector.broadcast %cst_7 : f32 to vector<8x128xf32>
    %12 = arith.mulf %11, %10 : vector<8x128xf32>
    %13 = arith.truncf %12 : vector<8x128xf32> to vector<8x128xbf16>
    %c0_8 = arith.constant 0 : index
    %c0_9 = arith.constant 0 : index
    %14 = vector.load %arg4[%c0_8, %c0_9] : memref<128x128xbf16, #tpu.memory_space<vmem>>, vector<128x128xbf16>
    %cst_10 = arith.constant dense<0.000000e+00> : vector<8x128xf32>
    %15 = tpu.matmul %13, %14, %cst_10 {dimension_numbers = #tpu.dot_dimension_numbers<[1], [0], [0], [1], [0, 0, 1, 1], [], []>} : vector<8x128xbf16>, vector<128x128xbf16>, vector<8x128xf32> -> vector<8x128xf32>
    %c0_11 = arith.constant 0 : index
    %c0_12 = arith.constant 0 : index
    %16 = vector.load %arg5[%c0_11, %c0_12] : memref<1x128xf32, #tpu.memory_space<vmem>>, vector<1x128xf32>
    %17 = vector.broadcast %16 : vector<1x128xf32> to vector<8x128xf32>
    %18 = arith.addf %15, %17 : vector<8x128xf32>
    %cst_13 = arith.constant dense<0xFF800000> : vector<8xf32>
    %19 = vector.multi_reduction <maximumf>, %18, %cst_13 [1] : vector<8x128xf32> to vector<8xf32>
    %20 = vector.shape_cast %19 : vector<8xf32> to vector<8x1xf32>
    %21 = vector.broadcast %20 : vector<8x1xf32> to vector<8x128xf32>
    %22 = arith.subf %18, %21 : vector<8x128xf32>
    %23 = math.exp %22 : vector<8x128xf32>
    %cst_14 = arith.constant dense<0.000000e+00> : vector<8xf32>
    %24 = vector.multi_reduction <add>, %23, %cst_14 [1] : vector<8x128xf32> to vector<8xf32>
    %25 = vector.shape_cast %24 : vector<8xf32> to vector<8x1xf32>
    %26 = tpu.reciprocal %25 {approx = true} : vector<8x1xf32> -> vector<8x1xf32>
    %27 = vector.broadcast %26 : vector<8x1xf32> to vector<8x128xf32>
    %28 = arith.mulf %23, %27 : vector<8x128xf32>
    %c0_15 = arith.constant 0 : index
    %c0_16 = arith.constant 0 : index
    %29 = vector.load %arg6[%c0_15, %c0_16] : memref<8x128xf32, #tpu.memory_space<vmem>>, vector<8x128xf32>
    tpu.vector_store %arg6[%c0_15, %c0_16], %28 {strides = array<i32>} : memref<8x128xf32, #tpu.memory_space<vmem>>, vector<8x128xf32>,
    return
  }
  func.func @transform_0(%arg0: i32) -> (i32, i32) {
    %c0_i32 = arith.constant 0 : i32
    %c0_i32_0 = arith.constant 0 : i32
    return %arg0, %c0_i32 : i32, i32
  }
  func.func @transform_1(%arg0: i32) -> (i32, i32) {
    %c0_i32 = arith.constant 0 : i32
    %c0_i32_0 = arith.constant 0 : i32
    %c0_i32_1 = arith.constant 0 : i32
    return %c0_i32, %c0_i32_0 : i32, i32
  }
  func.func @transform_2(%arg0: i32) -> (i32, i32) {
    %c0_i32 = arith.constant 0 : i32
    %c0_i32_0 = arith.constant 0 : i32
    %c0_i32_1 = arith.constant 0 : i32
    return %c0_i32, %c0_i32_0 : i32, i32
  }
  func.func @transform_3(%arg0: i32) -> (i32, i32) {
    %c0_i32 = arith.constant 0 : i32
    %c0_i32_0 = arith.constant 0 : i32
    %c0_i32_1 = arith.constant 0 : i32
    return %c0_i32, %c0_i32_0 : i32, i32
  }
  func.func @transform_4(%arg0: i32) -> (i32, i32) {
    %c0_i32 = arith.constant 0 : i32
    %c0_i32_0 = arith.constant 0 : i32
    %c0_i32_1 = arith.constant 0 : i32
    return %c0_i32, %c0_i32_0 : i32, i32
  }
  func.func @transform_5(%arg0: i32) -> (i32, i32) {
    %c0_i32 = arith.constant 0 : i32
    %c0_i32_0 = arith.constant 0 : i32
    return %arg0, %c0_i32 : i32, i32
  }
}

module attributes {stable_mosaic.version = 11 : i64} {
  func.func @_classifier_kernel(%arg0: i32, %arg1: memref<8x128xbf16, #tpu.memory_space<vmem>>, %arg2: memref<128x128xbf16, #tpu.memory_space<vmem>>, %arg3: memref<1x128xf32, #tpu.memory_space<vmem>>, %arg4: memref<128x128xbf16, #tpu.memory_space<vmem>>, %arg5: memref<1x128xf32, #tpu.memory_space<vmem>>, %arg6: memref<8x128xf32, #tpu.memory_space<vmem>>) attributes {dimension_semantics = [#tpu.dimension_semantics<parallel>], iteration_bounds = array<i64: 1>, scalar_prefetch = 0 : i64, scratch_operands = 0 : i64, tpu.core_type = #tpu.core_type<tc>, window_params = [{transform_indices = @transform_0, window_bounds = array<i64: 8, 128>}, {pipeline_mode = #tpu.pipeline_mode<synchronous>, transform_indices = @transform_1, window_bounds = array<i64: 128, 128>}, {pipeline_mode = #tpu.pipeline_mode<synchronous>, transform_indices = @transform_2, window_bounds = array<i64: 1, 128>}, {pipeline_mode = #tpu.pipeline_mode<synchronous>, transform_indices = @transform_3, window_bounds = array<i64: 128, 128>}, {pipeline_mode = #tpu.pipeline_mode<synchronous>, transform_indices = @transform_4, window_bounds = array<i64: 1, 128>}, {transform_indices = @transform_5, window_bounds = array<i64: 8, 128>}]} {
    %c0 = arith.constant 0 : index
    %c0_0 = arith.constant 0 : index
    %0 = vector.load %arg1[%c0, %c0_0] : memref<8x128xbf16, #tpu.memory_space<vmem>>, vector<8x128xbf16>
    %c0_1 = arith.constant 0 : index
    %c0_2 = arith.constant 0 : index
    %1 = vector.load %arg2[%c0_1, %c0_2] : memref<128x128xbf16, #tpu.memory_space<vmem>>, vector<128x128xbf16>
    %cst = arith.constant dense<0.000000e+00> : vector<8x128xf32>
    %2 = tpu.matmul %0, %1, %cst {dimension_numbers = #tpu.dot_dimension_numbers<[1], [0], [0], [1], [0, 0, 1, 1], [], []>} : vector<8x128xbf16>, vector<128x128xbf16>, vector<8x128xf32> -> vector<8x128xf32>
    %c0_3 = arith.constant 0 : index
    %c0_4 = arith.constant 0 : index
    %3 = vector.load %arg3[%c0_3, %c0_4] : memref<1x128xf32, #tpu.memory_space<vmem>>, vector<1x128xf32>
    %4 = vector.broadcast %3 : vector<1x128xf32> to vector<8x128xf32>
    %5 = arith.addf %2, %4 : vector<8x128xf32>
    %cst_5 = arith.constant 5.000000e-01 : f32
    %6 = vector.broadcast %cst_5 : f32 to vector<8x128xf32>
    %7 = arith.mulf %6, %5 : vector<8x128xf32>
    %8 = math.tanh %7 : vector<8x128xf32>
    %cst_6 = arith.constant 1.000000e+00 : f32
    %9 = vector.broadcast %cst_6 : f32 to vector<8x128xf32>
    %10 = arith.addf %8, %9 : vector<8x128xf32>
    %cst_7 = arith.constant 5.000000e-01 : f32
    %11 = vector.broadcast %cst_7 : f32 to vector<8x128xf32>
    %12 = arith.mulf %11, %10 : vector<8x128xf32>
    %13 = arith.truncf %12 : vector<8x128xf32> to vector<8x128xbf16>
    %c0_8 = arith.constant 0 : index
    %c0_9 = arith.constant 0 : index
    %14 = vector.load %arg4[%c0_8, %c0_9] : memref<128x128xbf16, #tpu.memory_space<vmem>>, vector<128x128xbf16>
    %cst_10 = arith.constant dense<0.000000e+00> : vector<8x128xf32>
    %15 = tpu.matmul %13, %14, %cst_10 {dimension_numbers = #tpu.dot_dimension_numbers<[1], [0], [0], [1], [0, 0, 1, 1], [], []>} : vector<8x128xbf16>, vector<128x128xbf16>, vector<8x128xf32> -> vector<8x128xf32>
    %c0_11 = arith.constant 0 : index
    %c0_12 = arith.constant 0 : index
    %16 = vector.load %arg5[%c0_11, %c0_12] : memref<1x128xf32, #tpu.memory_space<vmem>>, vector<1x128xf32>
    %17 = vector.broadcast %16 : vector<1x128xf32> to vector<8x128xf32>
    %18 = arith.addf %15, %17 : vector<8x128xf32>
    %cst_13 = arith.constant dense<0xFF800000> : vector<8xf32>
    %19 = vector.multi_reduction <maximumf>, %18, %cst_13 [1] : vector<8x128xf32> to vector<8xf32>
    %20 = vector.shape_cast %19 : vector<8xf32> to vector<8x1xf32>
    %21 = vector.broadcast %20 : vector<8x1xf32> to vector<8x128xf32>
    %22 = arith.subf %18, %21 : vector<8x128xf32>
    %23 = math.exp %22 : vector<8x128xf32>
    %cst_14 = arith.constant dense<0.000000e+00> : vector<8xf32>
    %24 = vector.multi_reduction <add>, %23, %cst_14 [1] : vector<8x128xf32> to vector<8xf32>
    %25 = vector.shape_cast %24 : vector<8xf32> to vector<8x1xf32>
    %26 = tpu.reciprocal %25 {approx = true} : vector<8x1xf32> -> vector<8x1xf32>
    %27 = vector.broadcast %26 : vector<8x1xf32> to vector<8x128xf32>
    %28 = arith.mulf %23, %27 : vector<8x128xf32>
    %c0_15 = arith.constant 0 : index
    %c0_16 = arith.constant 0 : index
    %29 = vector.load %arg6[%c0_15, %c0_16] : memref<8x128xf32, #tpu.memory_space<vmem>>, vector<8x128xf32>
    tpu.vector_store %arg6[%c0_15, %c0_16], %28 {strides = array<i32>} : memref<8x128xf32, #tpu.memory_space<vmem>>, vector<8x128xf32>,
    return
  }
  func.func @transform_0(%arg0: i32) -> (i32, i32) {
    %c0_i32 = arith.constant 0 : i32
    %c0_i32_0 = arith.constant 0 : i32
    return %arg0, %c0_i32 : i32, i32
  }
  func.func @transform_1(%arg0: i32) -> (i32, i32) {
    %c0_i32 = arith.constant 0 : i32
    %c0_i32_0 = arith.constant 0 : i32
    %c0_i32_1 = arith.constant 0 : i32
    return %c0_i32, %c0_i32_0 : i32, i32
  }
  func.func @transform_2(%arg0: i32) -> (i32, i32) {
    %c0_i32 = arith.constant 0 : i32
    %c0_i32_0 = arith.constant 0 : i32
    %c0_i32_1 = arith.constant 0 : i32
    return %c0_i32, %c0_i32_0 : i32, i32
  }
  func.func @transform_3(%arg0: i32) -> (i32, i32) {
    %c0_i32 = arith.constant 0 : i32
    %c0_i32_0 = arith.constant 0 : i32
    %c0_i32_1 = arith.constant 0 : i32
    return %c0_i32, %c0_i32_0 : i32, i32
  }
  func.func @transform_4(%arg0: i32) -> (i32, i32) {
    %c0_i32 = arith.constant 0 : i32
    %c0_i32_0 = arith.constant 0 : i32
    %c0_i32_1 = arith.constant 0 : i32
    return %c0_i32, %c0_i32_0 : i32, i32
  }
  func.func @transform_5(%arg0: i32) -> (i32, i32) {
    %c0_i32 = arith.constant 0 : i32
    %c0_i32_0 = arith.constant 0 : i32
    return %arg0, %c0_i32 : i32, i32
  }
}

</mosaic_0001>

<llo_original>
// kernel: tpu_custom_call.1
$region0: #{tpu_custom_call.1}
  #allocation0 [shape = 'u32[]', space=smem, size = 0x4, offset = 0x4, fixed_abs, tag = 'smem constant byte address 0x4 - core index']
  #allocation1 [shape = 'u32[72,128]{1,0:T(1,128)}', space=vmem, size = 0x9000, scoped, tag = 'internal scratch']
  %s0 = inlined_call_operand.hbm [shape: bf16[8,128], index: 0, kind: input, shape index: {}]
  %s1 = inlined_call_operand.hbm [shape: bf16[128,128], index: 1, kind: input, shape index: {}]
  %s2 = inlined_call_operand.vmem [shape: f32[1,128], index: 2, kind: input, shape index: {}]
  %s3 = inlined_call_operand.hbm [shape: bf16[128,128], index: 3, kind: input, shape index: {}]
  %s4 = inlined_call_operand.vmem [shape: f32[1,128], index: 4, kind: input, shape index: {}]
  %s5 = inlined_call_operand.hbm [shape: f32[8,128], index: 5, kind: output, shape index: {}]
  %s6 = sld [smem:[#allocation0]]
  $region42: #{tpu_custom_call.1} parent=0
    _
  %s8 = ssub.s32 1, %s6
  %s9 = scalar_select 0, %s8, %s6
  $region1: #{tpu_custom_call.1} parent=0
    #allocation2 [shape = 'u8[2048]{0}', space=vmem, size = 0x800, scoped, tag = 'input window, operand 0, single buffered']
    #allocation3 [shape = 's32[1]{0}', space=sflag, size = 0x4, scoped, tag = 'scoped memory for tpu_custom_call.1']
    #allocation4 [shape = 's32[1]{0}', space=sflag, size = 0x4, scoped, tag = 'scoped memory for tpu_custom_call.1']
    #allocation5 [shape = 'u8[32768]{0}', space=vmem, size = 0x8000, scoped, tag = 'input window, operand 1, single buffered']
    #allocation6 [shape = 's32[1]{0}', space=sflag, size = 0x4, scoped, tag = 'scoped memory for tpu_custom_call.1']
    #allocation7 [shape = 'u8[32768]{0}', space=vmem, size = 0x8000, scoped, tag = 'input window, operand 3, single buffered']
    #allocation8 [shape = 'u8[4096]{0}', space=vmem, size = 0x1000, scoped, tag = 'output window, operand 0, single buffered']
    %10 = vsyncpa [#allocation3], 0
    %11 = vsyncpa [#allocation6], 0
    %12 = vsyncpa [#allocation4], 0
    // Predicated region
    $region2: #{tpu_custom_call.1} parent=1 // pred_check
      _
    $region3: #{tpu_custom_call.1} parent=1 // pred_check_branch
      %14 = sbr.rel (0) target = $region5
    $region4: #{tpu_custom_call.1} parent=1 // pred_region
      %16 = vsyncadd [#allocation3], 0
      %s18 = sshll.u32 %s0, 4
      %s19 = int_to_ptr.hbm [resolvable:$true] %s18
      %s20 = sshll.u32 [#allocation2], 4
      %s21 = int_to_ptr.vmem [resolvable:$true] %s20
      %23 = dma.hbm_to_vmem [thread:$0]  %s19, 64, %s21, [#allocation3]
    $region5: #{tpu_custom_call.1} parent=1 // pred_fallthru
      _
    // Predicated region
    $region6: #{tpu_custom_call.1} parent=1 // pred_check
      _
    $region7: #{tpu_custom_call.1} parent=1 // pred_check_branch
      %25 = sbr.rel (0) target = $region9
    $region8: #{tpu_custom_call.1} parent=1 // pred_region
      %27 = vsyncadd [#allocation6], 0
      %s28 = sshll.u32 %s1, 4
      %s29 = int_to_ptr.hbm [resolvable:$true] %s28
      %s30 = sshll.u32 [#allocation5], 4
      %s31 = int_to_ptr.vmem [resolvable:$true] %s30
      %36 = dma.hbm_to_vmem [thread:$0]  %s29, 1024, %s31, [#allocation6], 64, 64, 4
    $region9: #{tpu_custom_call.1} parent=1 // pred_fallthru
      _
    // Predicated region
    $region10: #{tpu_custom_call.1} parent=1 // pred_check
      _
    $region11: #{tpu_custom_call.1} parent=1 // pred_check_branch
      %38 = sbr.rel (0) target = $region13
    $region12: #{tpu_custom_call.1} parent=1 // pred_region
      _
    $region13: #{tpu_custom_call.1} parent=1 // pred_fallthru
      _
    // Predicated region
    $region14: #{tpu_custom_call.1} parent=1 // pred_check
      _
    $region15: #{tpu_custom_call.1} parent=1 // pred_check_branch
      %40 = sbr.rel (0) target = $region17
    $region16: #{tpu_custom_call.1} parent=1 // pred_region
      %42 = vsyncadd [#allocation6], 0
      %s43 = sshll.u32 %s3, 4
      %s44 = int_to_ptr.hbm [resolvable:$true] %s43
      %s45 = sshll.u32 [#allocation7], 4
      %s46 = int_to_ptr.vmem [resolvable:$true] %s45
      %51 = dma.hbm_to_vmem [thread:$0]  %s44, 1024, %s46, [#allocation6], 64, 64, 4
    $region17: #{tpu_custom_call.1} parent=1 // pred_fallthru
      _
    // Predicated region
    $region18: #{tpu_custom_call.1} parent=1 // pred_check
      _
    $region19: #{tpu_custom_call.1} parent=1 // pred_check_branch
      %53 = sbr.rel (0) target = $region21
    $region20: #{tpu_custom_call.1} parent=1 // pred_region
      _
    $region21: #{tpu_custom_call.1} parent=1 // pred_fallthru
      _
    // Predicated region
    $region22: #{tpu_custom_call.1} parent=1 // pred_check
      _
    $region23: #{tpu_custom_call.1} parent=1 // pred_check_branch
      %55 = sbr.rel (0) target = $region25
    $region24: #{tpu_custom_call.1} parent=1 // pred_region
      %57 = dma.done [#allocation3], 64
    $region25: #{tpu_custom_call.1} parent=1 // pred_fallthru
      _
    // Predicated region
    $region26: #{tpu_custom_call.1} parent=1 // pred_check
      _
    $region27: #{tpu_custom_call.1} parent=1 // pred_check_branch
      %59 = sbr.rel (0) target = $region29
    $region28: #{tpu_custom_call.1} parent=1 // pred_region
      %61 = dma.done [#allocation6], 1024
    $region29: #{tpu_custom_call.1} parent=1 // pred_fallthru
      _
    // Predicated region
    $region30: #{tpu_custom_call.1} parent=1 // pred_check
      _
    $region31: #{tpu_custom_call.1} parent=1 // pred_check_branch
      %63 = sbr.rel (0) target = $region33
    $region32: #{tpu_custom_call.1} parent=1 // pred_region
      %65 = dma.done [#allocation6], 1024
    $region33: #{tpu_custom_call.1} parent=1 // pred_fallthru
      _
    %v66 = vld [vmem:[#allocation2] sm:$0xf]
    %v67 = vld [vmem:[#allocation5] sm:$0xf]
    %v68 = vld [vmem:[#allocation5 + $0x4] sm:$0xf]
    %v69 = vld [vmem:[#allocation5 + $0x8] sm:$0xf]
    %v70 = vld [vmem:[#allocation5 + $0xc] sm:$0xf]
    %v71 = vld [vmem:[#allocation5 + $0x10] sm:$0xf]
    %v72 = vld [vmem:[#allocation5 + $0x14] sm:$0xf]
    %v73 = vld [vmem:[#allocation5 + $0x18] sm:$0xf]
    %v74 = vld [vmem:[#allocation5 + $0x1c] sm:$0xf]
    %v75 = vld [vmem:[#allocation5 + $0x20] sm:$0xf]
    %v76 = vld [vmem:[#allocation5 + $0x24] sm:$0xf]
    %v77 = vld [vmem:[#allocation5 + $0x28] sm:$0xf]
    %v78 = vld [vmem:[#allocation5 + $0x2c] sm:$0xf]
    %v79 = vld [vmem:[#allocation5 + $0x30] sm:$0xf]
    %v80 = vld [vmem:[#allocation5 + $0x34] sm:$0xf]
    %v81 = vld [vmem:[#allocation5 + $0x38] sm:$0xf]
    %v82 = vld [vmem:[#allocation5 + $0x3c] sm:$0xf]
    %v83 = vld [vmem:[%s2] sm:$0x1]
    %v85 = vperm.slane %v83, 0
    %v103 = vunpack.c.l.b16 %v67
    %v104 = vunpack.c.l.b16 %v68
    %v105 = vunpack.c.l.b16 %v69
    %v106 = vunpack.c.l.b16 %v70
    %v107 = vunpack.c.l.b16 %v71
    %v108 = vunpack.c.l.b16 %v72
    %v109 = vunpack.c.l.b16 %v73
    %v110 = vunpack.c.l.b16 %v74
    %v111 = vunpack.c.l.b16 %v75
    %v112 = vunpack.c.l.b16 %v76
    %v113 = vunpack.c.l.b16 %v77
    %v114 = vunpack.c.l.b16 %v78
    %v115 = vunpack.c.l.b16 %v79
    %v116 = vunpack.c.l.b16 %v80
    %v117 = vunpack.c.l.b16 %v81
    %v118 = vunpack.c.l.b16 %v82
    %v119 = vpack.c.b16 %v104, %v103
    %v120 = vpack.c.b16 %v106, %v105
    %v121 = vpack.c.b16 %v108, %v107
    %v122 = vpack.c.b16 %v110, %v109
    %v123 = vpack.c.b16 %v112, %v111
    %v124 = vpack.c.b16 %v114, %v113
    %v125 = vpack.c.b16 %v116, %v115
    %v126 = vpack.c.b16 %v118, %v117
    %135 = vmatpush.bf16.msra.mxu0 %v126
    %136 = vmatpush.bf16.msra.mxu0 %v125
    %137 = vmatpush.bf16.msra.mxu0 %v124
    %138 = vmatpush.bf16.msra.mxu0 %v123
    %139 = vmatpush.bf16.msra.mxu0 %v122
    %140 = vmatpush.bf16.msra.mxu0 %v121
    %141 = vmatpush.bf16.msra.mxu0 %v120
    %142 = vmatpush.bf16.msra.mxu0 %v119
    %143 = vmatmul.bf16.gmra.mxu0 %v66
    %v144 = vpop.f32.mrf.mxu0
    %v145 = vadd.f32 %v85, %v144
    %v146 = vpop.f32.mrf.mxu0
    %147 = vdwg.mxu0
    %v148 = vmul.f32 %v145, 0.5
    %v149 = vtanh.pop %v148
    %v150 = vadd.f32 %v149, 1.0
    %v151 = vmul.f32 %v150, 0.5
    %v152 = vpack.c.bf16 %v151, %v151
    %v153 = vld [vmem:[#allocation7] sm:$0xf]
    %v154 = vld [vmem:[#allocation7 + $0x4] sm:$0xf]
    %v155 = vld [vmem:[#allocation7 + $0x8] sm:$0xf]
    %v156 = vld [vmem:[#allocation7 + $0xc] sm:$0xf]
    %v157 = vld [vmem:[#allocation7 + $0x10] sm:$0xf]
    %v158 = vld [vmem:[#allocation7 + $0x14] sm:$0xf]
    %v159 = vld [vmem:[#allocation7 + $0x18] sm:$0xf]
    %v160 = vld [vmem:[#allocation7 + $0x1c] sm:$0xf]
    %v161 = vld [vmem:[#allocation7 + $0x20] sm:$0xf]
    %v162 = vld [vmem:[#allocation7 + $0x24] sm:$0xf]
    %v163 = vld [vmem:[#allocation7 + $0x28] sm:$0xf]
    %v164 = vld [vmem:[#allocation7 + $0x2c] sm:$0xf]
    %v165 = vld [vmem:[#allocation7 + $0x30] sm:$0xf]
    %v166 = vld [vmem:[#allocation7 + $0x34] sm:$0xf]
    %v167 = vld [vmem:[#allocation7 + $0x38] sm:$0xf]
    %v168 = vld [vmem:[#allocation7 + $0x3c] sm:$0xf]
    %v169 = vld [vmem:[%s4] sm:$0x1]
    %v171 = vperm.slane %v169, 0
    %v189 = vunpack.c.l.b16 %v153
    %v190 = vunpack.c.l.b16 %v154
    %v191 = vunpack.c.l.b16 %v155
    %v192 = vunpack.c.l.b16 %v156
    %v193 = vunpack.c.l.b16 %v157
    %v194 = vunpack.c.l.b16 %v158
    %v195 = vunpack.c.l.b16 %v159
    %v196 = vunpack.c.l.b16 %v160
    %v197 = vunpack.c.l.b16 %v161
    %v198 = vunpack.c.l.b16 %v162
    %v199 = vunpack.c.l.b16 %v163
    %v200 = vunpack.c.l.b16 %v164
    %v201 = vunpack.c.l.b16 %v165
    %v202 = vunpack.c.l.b16 %v166
    %v203 = vunpack.c.l.b16 %v167
    %v204 = vunpack.c.l.b16 %v168
    %v205 = vpack.c.b16 %v190, %v189
    %v206 = vpack.c.b16 %v192, %v191
    %v207 = vpack.c.b16 %v194, %v193
    %v208 = vpack.c.b16 %v196, %v195
    %v209 = vpack.c.b16 %v198, %v197
    %v210 = vpack.c.b16 %v200, %v199
    %v211 = vpack.c.b16 %v202, %v201
    %v212 = vpack.c.b16 %v204, %v203
    %221 = vmatpush.bf16.msra.mxu0 %v212
    %222 = vmatpush.bf16.msra.mxu0 %v211
    %223 = vmatpush.bf16.msra.mxu0 %v210
    %224 = vmatpush.bf16.msra.mxu0 %v209
    %225 = vmatpush.bf16.msra.mxu0 %v208
    %226 = vmatpush.bf16.msra.mxu0 %v207
    %227 = vmatpush.bf16.msra.mxu0 %v206
    %228 = vmatpush.bf16.msra.mxu0 %v205
    %229 = vmatmul.bf16.gmra.mxu0 %v152
    %v230 = vpop.f32.mrf.mxu0
    %v231 = vadd.f32 %v171, %v230
    %v232 = vpop.f32.mrf.mxu0
    %233 = vdwg.mxu0
    %234 = vmax.xlane.f32.xlu0 %v231
    %v235 = vpop.xlane.xlu0 %234
    %v236 = vsub.f32 %v231, %v235
    %v237 = vmul.f32 %v236, 1.442695
    %v238 = vpow.pop %v237
    %239 = vadd.xlane.f32.xlu0 %v238
    %v240 = vpop.xlane.xlu0 %239
    %v241 = vrcp.pop %v240
    %v242 = vmul.f32 %v238, %v241
    %243 = vst [vmem:[#allocation8] sm:$0xff] %v242
    // Predicated region
    $region34: #{tpu_custom_call.1} parent=1 // pred_check
      _
    $region35: #{tpu_custom_call.1} parent=1 // pred_check_branch
      %245 = sbr.rel (0) target = $region37
    $region36: #{tpu_custom_call.1} parent=1 // pred_region
      %247 = vsyncadd [#allocation4], 0
      %s249 = sshll.u32 [#allocation8], 4
      %s250 = int_to_ptr.vmem [resolvable:$true] %s249
      %s251 = sshll.u32 %s5, 4
      %s252 = int_to_ptr.hbm [resolvable:$true] %s251
      %254 = dma.vmem_to_hbm [thread:$0]  %s250, 128, %s252, [#allocation4]
    $region37: #{tpu_custom_call.1} parent=1 // pred_fallthru
      _
    // Predicated region
    $region38: #{tpu_custom_call.1} parent=1 // pred_check
      _
    $region39: #{tpu_custom_call.1} parent=1 // pred_check_branch
      %256 = sbr.rel (0) target = $region41
    $region40: #{tpu_custom_call.1} parent=1 // pred_region
      %258 = dma.done [#allocation4], 128
    $region41: #{tpu_custom_call.1} parent=1 // pred_fallthru
      _
    %259 = vsyncpa [#allocation3], 1
    %260 = vsyncpa [#allocation6], 1
    %261 = vsyncpa [#allocation4], 1

// kernel: tpu_custom_call.1
$region0: #{tpu_custom_call.1}
  #allocation0 [shape = 'u32[]', space=smem, size = 0x4, offset = 0x4, fixed_abs, tag = 'smem constant byte address 0x4 - core index']
  #allocation1 [shape = 'u32[72,128]{1,0:T(1,128)}', space=vmem, size = 0x9000, scoped, tag = 'internal scratch']
  %s0 = inlined_call_operand.hbm [shape: bf16[8,128], index: 0, kind: input, shape index: {}]
  %s1 = inlined_call_operand.hbm [shape: bf16[128,128], index: 1, kind: input, shape index: {}]
  %s2 = inlined_call_operand.vmem [shape: f32[1,128], index: 2, kind: input, shape index: {}]
  %s3 = inlined_call_operand.hbm [shape: bf16[128,128], index: 3, kind: input, shape index: {}]
  %s4 = inlined_call_operand.vmem [shape: f32[1,128], index: 4, kind: input, shape index: {}]
  %s5 = inlined_call_operand.hbm [shape: f32[8,128], index: 5, kind: output, shape index: {}]
  %s6 = sld [smem:[#allocation0]]
  $region42: #{tpu_custom_call.1} parent=0
    _
  %s8 = ssub.s32 1, %s6
  %s9 = scalar_select 0, %s8, %s6
  $region1: #{tpu_custom_call.1} parent=0
    #allocation2 [shape = 'u8[2048]{0}', space=vmem, size = 0x800, scoped, tag = 'input window, operand 0, single buffered']
    #allocation3 [shape = 's32[1]{0}', space=sflag, size = 0x4, scoped, tag = 'scoped memory for tpu_custom_call.1']
    #allocation4 [shape = 's32[1]{0}', space=sflag, size = 0x4, scoped, tag = 'scoped memory for tpu_custom_call.1']
    #allocation5 [shape = 'u8[32768]{0}', space=vmem, size = 0x8000, scoped, tag = 'input window, operand 1, single buffered']
    #allocation6 [shape = 's32[1]{0}', space=sflag, size = 0x4, scoped, tag = 'scoped memory for tpu_custom_call.1']
    #allocation7 [shape = 'u8[32768]{0}', space=vmem, size = 0x8000, scoped, tag = 'input window, operand 3, single buffered']
    #allocation8 [shape = 'u8[4096]{0}', space=vmem, size = 0x1000, scoped, tag = 'output window, operand 0, single buffered']
    %10 = vsyncpa [#allocation3], 0
    %11 = vsyncpa [#allocation6], 0
    %12 = vsyncpa [#allocation4], 0
    // Predicated region
    $region2: #{tpu_custom_call.1} parent=1 // pred_check
      _
    $region3: #{tpu_custom_call.1} parent=1 // pred_check_branch
      %14 = sbr.rel (0) target = $region5
    $region4: #{tpu_custom_call.1} parent=1 // pred_region
      %16 = vsyncadd [#allocation3], 0
      %s18 = sshll.u32 %s0, 4
      %s19 = int_to_ptr.hbm [resolvable:$true] %s18
      %s20 = sshll.u32 [#allocation2], 4
      %s21 = int_to_ptr.vmem [resolvable:$true] %s20
      %23 = dma.hbm_to_vmem [thread:$0]  %s19, 64, %s21, [#allocation3]
    $region5: #{tpu_custom_call.1} parent=1 // pred_fallthru
      _
    // Predicated region
    $region6: #{tpu_custom_call.1} parent=1 // pred_check
      _
    $region7: #{tpu_custom_call.1} parent=1 // pred_check_branch
      %25 = sbr.rel (0) target = $region9
    $region8: #{tpu_custom_call.1} parent=1 // pred_region
      %27 = vsyncadd [#allocation6], 0
      %s28 = sshll.u32 %s1, 4
      %s29 = int_to_ptr.hbm [resolvable:$true] %s28
      %s30 = sshll.u32 [#allocation5], 4
      %s31 = int_to_ptr.vmem [resolvable:$true] %s30
      %36 = dma.hbm_to_vmem [thread:$0]  %s29, 1024, %s31, [#allocation6], 64, 64, 4
    $region9: #{tpu_custom_call.1} parent=1 // pred_fallthru
      _
    // Predicated region
    $region10: #{tpu_custom_call.1} parent=1 // pred_check
      _
    $region11: #{tpu_custom_call.1} parent=1 // pred_check_branch
      %38 = sbr.rel (0) target = $region13
    $region12: #{tpu_custom_call.1} parent=1 // pred_region
      _
    $region13: #{tpu_custom_call.1} parent=1 // pred_fallthru
      _
    // Predicated region
    $region14: #{tpu_custom_call.1} parent=1 // pred_check
      _
    $region15: #{tpu_custom_call.1} parent=1 // pred_check_branch
      %40 = sbr.rel (0) target = $region17
    $region16: #{tpu_custom_call.1} parent=1 // pred_region
      %42 = vsyncadd [#allocation6], 0
      %s43 = sshll.u32 %s3, 4
      %s44 = int_to_ptr.hbm [resolvable:$true] %s43
      %s45 = sshll.u32 [#allocation7], 4
      %s46 = int_to_ptr.vmem [resolvable:$true] %s45
      %51 = dma.hbm_to_vmem [thread:$0]  %s44, 1024, %s46, [#allocation6], 64, 64, 4
    $region17: #{tpu_custom_call.1} parent=1 // pred_fallthru
      _
    // Predicated region
    $region18: #{tpu_custom_call.1} parent=1 // pred_check
      _
    $region19: #{tpu_custom_call.1} parent=1 // pred_check_branch
      %53 = sbr.rel (0) target = $region21
    $region20: #{tpu_custom_call.1} parent=1 // pred_region
      _
    $region21: #{tpu_custom_call.1} parent=1 // pred_fallthru
      _
    // Predicated region
    $region22: #{tpu_custom_call.1} parent=1 // pred_check
      _
    $region23: #{tpu_custom_call.1} parent=1 // pred_check_branch
      %55 = sbr.rel (0) target = $region25
    $region24: #{tpu_custom_call.1} parent=1 // pred_region
      %57 = dma.done [#allocation3], 64
    $region25: #{tpu_custom_call.1} parent=1 // pred_fallthru
      _
    // Predicated region
    $region26: #{tpu_custom_call.1} parent=1 // pred_check
      _
    $region27: #{tpu_custom_call.1} parent=1 // pred_check_branch
      %59 = sbr.rel (0) target = $region29
    $region28: #{tpu_custom_call.1} parent=1 // pred_region
      %61 = dma.done [#allocation6], 1024
    $region29: #{tpu_custom_call.1} parent=1 // pred_fallthru
      _
    // Predicated region
    $region30: #{tpu_custom_call.1} parent=1 // pred_check
      _
    $region31: #{tpu_custom_call.1} parent=1 // pred_check_branch
      %63 = sbr.rel (0) target = $region33
    $region32: #{tpu_custom_call.1} parent=1 // pred_region
      %65 = dma.done [#allocation6], 1024
    $region33: #{tpu_custom_call.1} parent=1 // pred_fallthru
      _
    %v66 = vld [vmem:[#allocation2] sm:$0xf]
    %v67 = vld [vmem:[#allocation5] sm:$0xf]
    %v68 = vld [vmem:[#allocation5 + $0x4] sm:$0xf]
    %v69 = vld [vmem:[#allocation5 + $0x8] sm:$0xf]
    %v70 = vld [vmem:[#allocation5 + $0xc] sm:$0xf]
    %v71 = vld [vmem:[#allocation5 + $0x10] sm:$0xf]
    %v72 = vld [vmem:[#allocation5 + $0x14] sm:$0xf]
    %v73 = vld [vmem:[#allocation5 + $0x18] sm:$0xf]
    %v74 = vld [vmem:[#allocation5 + $0x1c] sm:$0xf]
    %v75 = vld [vmem:[#allocation5 + $0x20] sm:$0xf]
    %v76 = vld [vmem:[#allocation5 + $0x24] sm:$0xf]
    %v77 = vld [vmem:[#allocation5 + $0x28] sm:$0xf]
    %v78 = vld [vmem:[#allocation5 + $0x2c] sm:$0xf]
    %v79 = vld [vmem:[#allocation5 + $0x30] sm:$0xf]
    %v80 = vld [vmem:[#allocation5 + $0x34] sm:$0xf]
    %v81 = vld [vmem:[#allocation5 + $0x38] sm:$0xf]
    %v82 = vld [vmem:[#allocation5 + $0x3c] sm:$0xf]
    %v83 = vld [vmem:[%s2] sm:$0x1]
    %v85 = vperm.slane %v83, 0
    %v103 = vunpack.c.l.b16 %v67
    %v104 = vunpack.c.l.b16 %v68
    %v105 = vunpack.c.l.b16 %v69
    %v106 = vunpack.c.l.b16 %v70
    %v107 = vunpack.c.l.b16 %v71
    %v108 = vunpack.c.l.b16 %v72
    %v109 = vunpack.c.l.b16 %v73
    %v110 = vunpack.c.l.b16 %v74
    %v111 = vunpack.c.l.b16 %v75
    %v112 = vunpack.c.l.b16 %v76
    %v113 = vunpack.c.l.b16 %v77
    %v114 = vunpack.c.l.b16 %v78
    %v115 = vunpack.c.l.b16 %v79
    %v116 = vunpack.c.l.b16 %v80
    %v117 = vunpack.c.l.b16 %v81
    %v118 = vunpack.c.l.b16 %v82
    %v119 = vpack.c.b16 %v104, %v103
    %v120 = vpack.c.b16 %v106, %v105
    %v121 = vpack.c.b16 %v108, %v107
    %v122 = vpack.c.b16 %v110, %v109
    %v123 = vpack.c.b16 %v112, %v111
    %v124 = vpack.c.b16 %v114, %v113
    %v125 = vpack.c.b16 %v116, %v115
    %v126 = vpack.c.b16 %v118, %v117
    %135 = vmatpush.bf16.msra.mxu0 %v126
    %136 = vmatpush.bf16.msra.mxu0 %v125
    %137 = vmatpush.bf16.msra.mxu0 %v124
    %138 = vmatpush.bf16.msra.mxu0 %v123
    %139 = vmatpush.bf16.msra.mxu0 %v122
    %140 = vmatpush.bf16.msra.mxu0 %v121
    %141 = vmatpush.bf16.msra.mxu0 %v120
    %142 = vmatpush.bf16.msra.mxu0 %v119
    %143 = vmatmul.bf16.gmra.mxu0 %v66
    %v144 = vpop.f32.mrf.mxu0
    %v145 = vadd.f32 %v85, %v144
    %v146 = vpop.f32.mrf.mxu0
    %147 = vdwg.mxu0
    %v148 = vmul.f32 %v145, 0.5
    %v149 = vtanh.pop %v148
    %v150 = vadd.f32 %v149, 1.0
    %v151 = vmul.f32 %v150, 0.5
    %v152 = vpack.c.bf16 %v151, %v151
    %v153 = vld [vmem:[#allocation7] sm:$0xf]
    %v154 = vld [vmem:[#allocation7 + $0x4] sm:$0xf]
    %v155 = vld [vmem:[#allocation7 + $0x8] sm:$0xf]
    %v156 = vld [vmem:[#allocation7 + $0xc] sm:$0xf]
    %v157 = vld [vmem:[#allocation7 + $0x10] sm:$0xf]
    %v158 = vld [vmem:[#allocation7 + $0x14] sm:$0xf]
    %v159 = vld [vmem:[#allocation7 + $0x18] sm:$0xf]
    %v160 = vld [vmem:[#allocation7 + $0x1c] sm:$0xf]
    %v161 = vld [vmem:[#allocation7 + $0x20] sm:$0xf]
    %v162 = vld [vmem:[#allocation7 + $0x24] sm:$0xf]
    %v163 = vld [vmem:[#allocation7 + $0x28] sm:$0xf]
    %v164 = vld [vmem:[#allocation7 + $0x2c] sm:$0xf]
    %v165 = vld [vmem:[#allocation7 + $0x30] sm:$0xf]
    %v166 = vld [vmem:[#allocation7 + $0x34] sm:$0xf]
    %v167 = vld [vmem:[#allocation7 + $0x38] sm:$0xf]
    %v168 = vld [vmem:[#allocation7 + $0x3c] sm:$0xf]
    %v169 = vld [vmem:[%s4] sm:$0x1]
    %v171 = vperm.slane %v169, 0
    %v189 = vunpack.c.l.b16 %v153
    %v190 = vunpack.c.l.b16 %v154
    %v191 = vunpack.c.l.b16 %v155
    %v192 = vunpack.c.l.b16 %v156
    %v193 = vunpack.c.l.b16 %v157
    %v194 = vunpack.c.l.b16 %v158
    %v195 = vunpack.c.l.b16 %v159
    %v196 = vunpack.c.l.b16 %v160
    %v197 = vunpack.c.l.b16 %v161
    %v198 = vunpack.c.l.b16 %v162
    %v199 = vunpack.c.l.b16 %v163
    %v200 = vunpack.c.l.b16 %v164
    %v201 = vunpack.c.l.b16 %v165
    %v202 = vunpack.c.l.b16 %v166
    %v203 = vunpack.c.l.b16 %v167
    %v204 = vunpack.c.l.b16 %v168
    %v205 = vpack.c.b16 %v190, %v189
    %v206 = vpack.c.b16 %v192, %v191
    %v207 = vpack.c.b16 %v194, %v193
    %v208 = vpack.c.b16 %v196, %v195
    %v209 = vpack.c.b16 %v198, %v197
    %v210 = vpack.c.b16 %v200, %v199
    %v211 = vpack.c.b16 %v202, %v201
    %v212 = vpack.c.b16 %v204, %v203
    %221 = vmatpush.bf16.msra.mxu0 %v212
    %222 = vmatpush.bf16.msra.mxu0 %v211
    %223 = vmatpush.bf16.msra.mxu0 %v210
    %224 = vmatpush.bf16.msra.mxu0 %v209
    %225 = vmatpush.bf16.msra.mxu0 %v208
    %226 = vmatpush.bf16.msra.mxu0 %v207
    %227 = vmatpush.bf16.msra.mxu0 %v206
    %228 = vmatpush.bf16.msra.mxu0 %v205
    %229 = vmatmul.bf16.gmra.mxu0 %v152
    %v230 = vpop.f32.mrf.mxu0
    %v231 = vadd.f32 %v171, %v230
    %v232 = vpop.f32.mrf.mxu0
    %233 = vdwg.mxu0
    %234 = vmax.xlane.f32.xlu0 %v231
    %v235 = vpop.xlane.xlu0 %234
    %v236 = vsub.f32 %v231, %v235
    %v237 = vmul.f32 %v236, 1.442695
    %v238 = vpow.pop %v237
    %239 = vadd.xlane.f32.xlu0 %v238
    %v240 = vpop.xlane.xlu0 %239
    %v241 = vrcp.pop %v240
    %v242 = vmul.f32 %v238, %v241
    %243 = vst [vmem:[#allocation8] sm:$0xff] %v242
    // Predicated region
    $region34: #{tpu_custom_call.1} parent=1 // pred_check
      _
    $region35: #{tpu_custom_call.1} parent=1 // pred_check_branch
      %245 = sbr.rel (0) target = $region37
    $region36: #{tpu_custom_call.1} parent=1 // pred_region
      %247 = vsyncadd [#allocation4], 0
      %s249 = sshll.u32 [#allocation8], 4
      %s250 = int_to_ptr.vmem [resolvable:$true] %s249
      %s251 = sshll.u32 %s5, 4
      %s252 = int_to_ptr.hbm [resolvable:$true] %s251
      %254 = dma.vmem_to_hbm [thread:$0]  %s250, 128, %s252, [#allocation4]
    $region37: #{tpu_custom_call.1} parent=1 // pred_fallthru
      _
    // Predicated region
    $region38: #{tpu_custom_call.1} parent=1 // pred_check
      _
    $region39: #{tpu_custom_call.1} parent=1 // pred_check_branch
      %256 = sbr.rel (0) target = $region41
    $region40: #{tpu_custom_call.1} parent=1 // pred_region
      %258 = dma.done [#allocation4], 128
    $region41: #{tpu_custom_call.1} parent=1 // pred_fallthru
      _
    %259 = vsyncpa [#allocation3], 1
    %260 = vsyncpa [#allocation6], 1
    %261 = vsyncpa [#allocation4], 1

</llo_original>
